<compile_context>
chip_gen: v6e
topology: v6e:2x2x1
jax: 0.10.0
libtpu: 0.0.40
codegen_flags: <defaults>
</compile_context>

<pallas_src>
import functools

import numpy as np

import jax
import jax.numpy as jnp
from jax import lax
from jax.experimental import pallas as pl
from jax.experimental.pallas import tpu as pltpu

EPS = 1e-5  # nn.LayerNorm default


def _vmem_budget_bytes():
    """~75% of per-core VMEM; leaves headroom on v7x's 64 MiB, uses v5e/v6e's 128 MiB."""
    try:
        cap = int(pltpu.get_tpu_info().vmem_capacity_bytes)
    except Exception:
        cap = 64 * 1024 * 1024  # conservative fallback (v7x per-TC size)
    return (cap * 3) // 4


# --------------------------------------------------------------------------- #
# Kernels
# --------------------------------------------------------------------------- #
def _prenorm_kernel_resident(x_ref, w_ref, b_ref, o_ref):
    """1-D grid over row tiles; full (D, D) weight resident in VMEM.

    LayerNorm statistics in f32 (biased variance, eps inside rsqrt, matching
    torch.nn.LayerNorm); normalized activations cast to the weight dtype so
    bf16 weights drive the MXU in bf16 with an f32 accumulator.  The LayerNorm
    affine (gamma, beta) is pre-folded into (w, b) in the wrapper.
    """
    x = x_ref[...].astype(jnp.float32)
    mean = jnp.mean(x, axis=-1, keepdims=True)
    xc = x - mean
    var = jnp.mean(xc * xc, axis=-1, keepdims=True)
    y = (xc * lax.rsqrt(var + EPS)).astype(w_ref.dtype)
    out = jnp.dot(y, w_ref[...], preferred_element_type=jnp.float32)
    o_ref[...] = (out + b_ref[...].astype(jnp.float32)).astype(o_ref.dtype)


def _prenorm_kernel_tiled(x_ref, w_ref, b_ref, o_ref, y_ref):
    """2-D grid (row tiles x column tiles) for weights too large for VMEM.

    LayerNorm runs ONCE per row tile (at j == 0) and the normalized rows are
    cached in a VMEM scratch; subsequent column tiles only do the matmul.
    """
    @pl.when(pl.program_id(1) == 0)
    def _():
        x = x_ref[...].astype(jnp.float32)
        mean = jnp.mean(x, axis=-1, keepdims=True)
        xc = x - mean
        var = jnp.mean(xc * xc, axis=-1, keepdims=True)
        y_ref[...] = (xc * lax.rsqrt(var + EPS)).astype(y_ref.dtype)

    out = jnp.dot(y_ref[...], w_ref[...], preferred_element_type=jnp.float32)
    o_ref[...] = (out + b_ref[...].astype(jnp.float32)).astype(o_ref.dtype)


# --------------------------------------------------------------------------- #
# Tiling heuristics
# --------------------------------------------------------------------------- #
def _pick_row_tile(n_rows, per_row_bytes, fixed_bytes, budget, block_rows):
    """Pick a row tile (bm) and padded row count.

    Goals: fit the VMEM budget, keep >= 2 row tiles (v7x megacore), and prefer
    a bm that divides n_rows so no pad/slice HBM round-trip is needed.
    """
    avail = max(budget - fixed_bytes, 8 * per_row_bytes)
    bm = int(min(block_rows, avail // per_row_bytes))
    bm = max(8, (bm // 8) * 8)
    if n_rows >= 16:
        half = ((((n_rows + 1) // 2) + 7) // 8) * 8
        bm = min(bm, max(8, half))

    if n_rows % 8 != 0:
        if n_rows <= bm:
            return n_rows, n_rows              # one full-extent block, no padding
        n_rows_p = -(-n_rows // bm) * bm
        return bm, n_rows_p

    # n_rows is a multiple of 8: look for a dividing tile (no padding needed).
    best = 0
    for cand in range(min(bm, n_rows), 7, -8):
        if n_rows % cand == 0:
            best = cand
            break
    if best >= max(8, bm // 4):
        return best, n_rows
    n_rows_p = -(-n_rows // bm) * bm           # divisor too small -> pad instead
    return bm, n_rows_p


# --------------------------------------------------------------------------- #
# Wrapper
# --------------------------------------------------------------------------- #
@functools.partial(
    jax.jit,
    static_argnames=("compute_dtype", "block_rows", "block_cols", "force_tiled"),
)
def _prenorm_impl(x, gamma, beta, w, b, compute_dtype, block_rows, block_cols,
                  force_tiled):
    B, S, D = x.shape
    n_rows = B * S
    cdt = np.dtype(compute_dtype)

    # ---- fold the LayerNorm affine into the linear layer (exact in f32) ----
    #   ((x-mu)*inv*gamma + beta) @ W + b
    #     == ((x-mu)*inv) @ (gamma[:,None]*W) + (beta @ W + b)
    # Under jit with static weights XLA folds this once; callers on a hot
    # small-batch loop can precompute and pass w/b already folded.
    gamma_f = gamma.reshape(D).astype(jnp.float32)
    beta_f = beta.reshape(D).astype(jnp.float32)
    w_f = w.astype(jnp.float32)
    w_eff = (gamma_f[:, None] * w_f).astype(cdt)                       # (D, D)
    b_eff = (beta_f @ w_f + b.reshape(D).astype(jnp.float32)).reshape(1, D)

    x_b = np.dtype(x.dtype).itemsize
    w_b = cdt.itemsize
    budget = _vmem_budget_bytes()

    # ---- resident-weight path when the full D x D weight fits VMEM ---------
    resident_fixed = 2 * D * D * w_b + D * 4          # (double-buffered) W' + b'
    use_resident = (not force_tiled) and (resident_fixed <= budget // 2)

    if block_cols is None:
        if use_resident:
            block_cols = D
        elif D % 256 == 0:
            block_cols = 256
        elif D % 128 == 0:
            block_cols = 128
        else:
            block_cols = D
    assert D % block_cols == 0

    # per-row VMEM cost: double-buffered x + out tiles, LN scratch/cast, f32 temps.
    per_row = 2 * D * x_b + 2 * block_cols * x_b + D * w_b + 3 * D * 4
    fixed = resident_fixed if use_resident else (2 * D * block_cols * w_b + D * 4)
    bm, n_rows_p = _pick_row_tile(n_rows, per_row, fixed, budget, block_rows)

    xr = x.reshape(n_rows, D)
    if n_rows_p != n_rows:
        # Zero padding is numerically safe (var=0 -> rsqrt(eps)); rows sliced off.
        xr = jnp.pad(xr, ((0, n_rows_p - n_rows), (0, 0)))

    if use_resident:
        out = pl.pallas_call(
            _prenorm_kernel_resident,
            out_shape=jax.ShapeDtypeStruct((n_rows_p, D), x.dtype),
            grid_spec=pltpu.PrefetchScalarGridSpec(
                num_scalar_prefetch=0,
                grid=(n_rows_p // bm,),
                in_specs=[
                    pl.BlockSpec((bm, D), lambda i: (i, 0)),   # x row tile
                    pl.BlockSpec((D, D), lambda i: (0, 0)),    # resident W'
                    pl.BlockSpec((1, D), lambda i: (0, 0)),    # resident b'
                ],
                out_specs=pl.BlockSpec((bm, D), lambda i: (i, 0)),
            ),
            compiler_params=pltpu.CompilerParams(
                dimension_semantics=("parallel",),
                vmem_limit_bytes=int(budget),
            ),
        )(xr, w_eff, b_eff)
    else:
        out = pl.pallas_call(
            _prenorm_kernel_tiled,
            out_shape=jax.ShapeDtypeStruct((n_rows_p, D), x.dtype),
            grid_spec=pltpu.PrefetchScalarGridSpec(
                num_scalar_prefetch=0,
                grid=(n_rows_p // bm, D // block_cols),
                in_specs=[
                    # x block index constant over j -> DMA'd once per row tile.
                    pl.BlockSpec((bm, D), lambda i, j: (i, 0)),
                    pl.BlockSpec((D, block_cols), lambda i, j: (0, j)),   # W' tile
                    pl.BlockSpec((1, block_cols), lambda i, j: (0, j)),   # b' tile
                ],
                out_specs=pl.BlockSpec((bm, block_cols), lambda i, j: (i, j)),
                scratch_shapes=[pltpu.VMEM((bm, D), cdt)],    # cached LN output
            ),
            compiler_params=pltpu.CompilerParams(
                dimension_semantics=("parallel", "arbitrary"),
                vmem_limit_bytes=int(budget),
            ),
        )(xr, w_eff, b_eff)

    if n_rows_p != n_rows:
        out = out[:n_rows]
    return out.reshape(B, S, D)


def prenorm(x, gamma, beta, w, b, *, compute_dtype=None, block_rows=512,
            block_cols=None, force_tiled=False):
    """PreNorm(dim, Linear(dim, dim)) forward: Linear(LayerNorm(x)).

    x: (B, S, D); gamma/beta: (D,) LayerNorm affine; w: (D, D); b: (D,).
    compute_dtype: MXU input dtype (default: w.dtype; pass jnp.bfloat16 for
    full MXU throughput when numerics allow).
    """
    cdt = np.dtype(w.dtype if compute_dtype is None else compute_dtype)
    return _prenorm_impl(x, gamma, beta, w, b, cdt.name, block_rows,
                         block_cols, force_tiled)


def prenorm_ref(x, gamma, beta, w, b):
    # Literal (unfused) LayerNorm -> Linear reference.
    xf = x.astype(jnp.float32)
    mean = jnp.mean(xf, axis=-1, keepdims=True)
    var = jnp.mean((xf - mean) ** 2, axis=-1, keepdims=True)
    y = (xf - mean) * lax.rsqrt(var + EPS) * gamma + beta
    return (y @ w.astype(jnp.float32) + b).astype(x.dtype)


if __name__ == "__main__":
    key = jax.random.PRNGKey(0)
    B, S, D = 2, 8, 128  # small, lane-dense demo shapes

    kx, kg, kb, kw, kbias = jax.random.split(key, 5)
    x = jax.random.normal(kx, (B, S, D), dtype=jnp.float32)
    gamma = jnp.ones((D,), jnp.float32) + 0.01 * jax.random.normal(kg, (D,), jnp.float32)
    beta = 0.01 * jax.random.normal(kb, (D,), jnp.float32)
    w = 0.05 * jax.random.normal(kw, (D, D), dtype=jnp.float32)
    bias = 0.01 * jax.random.normal(kbias, (D,), dtype=jnp.float32)

    ref = prenorm_ref(x, gamma, beta, w, bias)

    # 1) Resident-weight path (f32 MXU, matches the f32 weights).
    out = prenorm(x, gamma, beta, w, bias)
    jax.block_until_ready(out)
    assert out.shape == ref.shape
    assert jnp.allclose(out, ref, atol=5e-4, rtol=5e-4), "resident path mismatch"

    # 2) bf16 compute path (bf16 MXU inputs, f32 accumulate) — looser tolerance.
    out_bf16 = prenorm(x, gamma, beta, w, bias, compute_dtype=jnp.bfloat16)
    jax.block_until_ready(out_bf16)
    assert jnp.allclose(out_bf16, ref, atol=3e-2, rtol=3e-2), "bf16 path mismatch"

    # 3) Column-tiled path with cached-LayerNorm scratch (forced at small D).
    key2 = jax.random.PRNGKey(1)
    D2 = 256
    kx2, kg2, kb2, kw2, kbias2 = jax.random.split(key2, 5)
    x2 = jax.random.normal(kx2, (B, S, D2), dtype=jnp.float32)
    gamma2 = jnp.ones((D2,), jnp.float32) + 0.01 * jax.random.normal(kg2, (D2,), jnp.float32)
    beta2 = 0.01 * jax.random.normal(kb2, (D2,), jnp.float32)
    w2 = 0.05 * jax.random.normal(kw2, (D2, D2), dtype=jnp.float32)
    bias2 = 0.01 * jax.random.normal(kbias2, (D2,), dtype=jnp.float32)

    out2 = prenorm(x2, gamma2, beta2, w2, bias2, force_tiled=True, block_cols=128)
    jax.block_until_ready(out2)
    ref2 = prenorm_ref(x2, gamma2, beta2, w2, bias2)
    assert jnp.allclose(out2, ref2, atol=5e-4, rtol=5e-4), "tiled path mismatch"

    print("KERNEL_OK")
</pallas_src>

<mosaic_0001>
module attributes {stable_mosaic.version = 11 : i64} {
  func.func @_prenorm_kernel_resident(%arg0: i32, %arg1: memref<8x128xf32, #tpu.memory_space<vmem>>, %arg2: memref<128x128xf32, #tpu.memory_space<vmem>>, %arg3: memref<1x128xf32, #tpu.memory_space<vmem>>, %arg4: memref<8x128xf32, #tpu.memory_space<vmem>>) attributes {dimension_semantics = [#tpu.dimension_semantics<parallel>], iteration_bounds = array<i64: 2>, scalar_prefetch = 0 : i64, scratch_operands = 0 : i64, tpu.core_type = #tpu.core_type<tc>, window_params = [{transform_indices = @transform_0, window_bounds = array<i64: 8, 128>}, {pipeline_mode = #tpu.pipeline_mode<synchronous>, transform_indices = @transform_1, window_bounds = array<i64: 128, 128>}, {pipeline_mode = #tpu.pipeline_mode<synchronous>, transform_indices = @transform_2, window_bounds = array<i64: 1, 128>}, {transform_indices = @transform_3, window_bounds = array<i64: 8, 128>}]} {
    %c0 = arith.constant 0 : index
    %c0_0 = arith.constant 0 : index
    %0 = vector.load %arg1[%c0, %c0_0] : memref<8x128xf32, #tpu.memory_space<vmem>>, vector<8x128xf32>
    %cst = arith.constant dense<0.000000e+00> : vector<8xf32>
    %1 = vector.multi_reduction <add>, %0, %cst [1] : vector<8x128xf32> to vector<8xf32>
    %2 = vector.shape_cast %1 : vector<8xf32> to vector<8x1xf32>
    %cst_1 = arith.constant 1.280000e+02 : f32
    %3 = vector.broadcast %cst_1 : f32 to vector<8x1xf32>
    %4 = arith.divf %2, %3 : vector<8x1xf32>
    %5 = vector.broadcast %4 : vector<8x1xf32> to vector<8x128xf32>
    %6 = arith.subf %0, %5 : vector<8x128xf32>
    %7 = arith.mulf %6, %6 : vector<8x128xf32>
    %cst_2 = arith.constant dense<0.000000e+00> : vector<8xf32>
    %8 = vector.multi_reduction <add>, %7, %cst_2 [1] : vector<8x128xf32> to vector<8xf32>
    %9 = vector.shape_cast %8 : vector<8xf32> to vector<8x1xf32>
    %cst_3 = arith.constant 1.280000e+02 : f32
    %10 = vector.broadcast %cst_3 : f32 to vector<8x1xf32>
    %11 = arith.divf %9, %10 : vector<8x1xf32>
    %cst_4 = arith.constant 9.99999974E-6 : f32
    %12 = vector.broadcast %cst_4 : f32 to vector<8x1xf32>
    %13 = arith.addf %11, %12 : vector<8x1xf32>
    %14 = math.rsqrt %13 : vector<8x1xf32>
    %15 = vector.broadcast %14 : vector<8x1xf32> to vector<8x128xf32>
    %16 = arith.mulf %6, %15 : vector<8x128xf32>
    %c0_5 = arith.constant 0 : index
    %c0_6 = arith.constant 0 : index
    %17 = vector.load %arg2[%c0_5, %c0_6] : memref<128x128xf32, #tpu.memory_space<vmem>>, vector<128x128xf32>
    %cst_7 = arith.constant dense<0.000000e+00> : vector<8x128xf32>
    %18 = tpu.matmul %16, %17, %cst_7 {dimension_numbers = #tpu.dot_dimension_numbers<[1], [0], [0], [1], [0, 0, 1, 1], [], []>} : vector<8x128xf32>, vector<128x128xf32>, vector<8x128xf32> -> vector<8x128xf32>
    %c0_8 = arith.constant 0 : index
    %c0_9 = arith.constant 0 : index
    %19 = vector.load %arg3[%c0_8, %c0_9] : memref<1x128xf32, #tpu.memory_space<vmem>>, vector<1x128xf32>
    %20 = vector.broadcast %19 : vector<1x128xf32> to vector<8x128xf32>
    %21 = arith.addf %18, %20 : vector<8x128xf32>
    %c0_10 = arith.constant 0 : index
    %c0_11 = arith.constant 0 : index
    %22 = vector.load %arg4[%c0_10, %c0_11] : memref<8x128xf32, #tpu.memory_space<vmem>>, vector<8x128xf32>
    tpu.vector_store %arg4[%c0_10, %c0_11], %21 {strides = array<i32>} : memref<8x128xf32, #tpu.memory_space<vmem>>, vector<8x128xf32>,
    return
  }
  func.func @transform_0(%arg0: i32) -> (i32, i32) {
    %c0_i32 = arith.constant 0 : i32
    %c0_i32_0 = arith.constant 0 : i32
    return %arg0, %c0_i32 : i32, i32
  }
  func.func @transform_1(%arg0: i32) -> (i32, i32) {
    %c0_i32 = arith.constant 0 : i32
    %c0_i32_0 = arith.constant 0 : i32
    %c0_i32_1 = arith.constant 0 : i32
    return %c0_i32, %c0_i32_0 : i32, i32
  }
  func.func @transform_2(%arg0: i32) -> (i32, i32) {
    %c0_i32 = arith.constant 0 : i32
    %c0_i32_0 = arith.constant 0 : i32
    %c0_i32_1 = arith.constant 0 : i32
    return %c0_i32, %c0_i32_0 : i32, i32
  }
  func.func @transform_3(%arg0: i32) -> (i32, i32) {
    %c0_i32 = arith.constant 0 : i32
    %c0_i32_0 = arith.constant 0 : i32
    return %arg0, %c0_i32 : i32, i32
  }
}

</mosaic_0001>

<llo_original>
// kernel: _prenorm_impl.1
$region0: #{_prenorm_impl.1}
  #allocation0 [shape = 'u32[]', space=smem, size = 0x4, offset = 0x4, fixed_abs, tag = 'smem constant byte address 0x4 - core index']
  #allocation1 [shape = 'u32[144,128]{1,0:T(1,128)}', space=vmem, size = 0x12000, scoped, tag = 'internal scratch']
  %s0 = inlined_call_operand.vmem [shape: f32[16,128], index: 0, kind: input, shape index: {}]
  %s1 = inlined_call_operand.vmem [shape: f32[128,128], index: 1, kind: input, shape index: {}]
  %s2 = inlined_call_operand.vmem [shape: f32[1,128], index: 2, kind: input, shape index: {}]
  %s3 = inlined_call_operand.hbm [shape: f32[16,128], index: 3, kind: output, shape index: {}]
  %s4 = sld [smem:[#allocation0]]
  $region45: #{_prenorm_impl.1} parent=0
    _
  %s6 = ssub.s32 1, %s4
  %s7 = scalar_select 0, %s6, %s4
  $region1: #{_prenorm_impl.1} parent=0
    #allocation2 [shape = 'u8[8192]{0}', space=vmem, size = 0x2000, scoped, tag = 'output window, operand 0']
    #allocation3 [shape = 's32[2]{0}', space=sflag, size = 0x8, scoped, tag = 'scoped memory for _prenorm_impl.1']
    %8 = vsyncpa [#allocation3], 0
    %s9 = scalar_lea.sflag [#allocation3], 1
    %10 = vsyncpa %s9, 0
    loop: start=0, step=1, limit=4
    $region2: #{_prenorm_impl.1} parent=1 // loop_pre_header
      _
    $region3: #{_prenorm_impl.1} parent=1 // loop_header
      %s12 = sphi 0, %s16
      %p13 = scmp.ge.s32.totalorder %s12, 4
      %s22 = sphi 0, %s24
      %s25 = sphi 0, %s22
      %s26 = sphi 0, %s25
      %s42 = sphi 0, %s26
      %s46 = sphi 0, %s46
      %s48 = sphi 0, %s46
      %s49 = sphi 0, %s48
      %s63 = sphi 0, %s49
      %s67 = sphi 0, %s67
      %s69 = sphi 0, %s67
      %s70 = sphi 0, %s69
      %s84 = sphi 0, %s70
      %s90 = sphi 0, %s92
      %s93 = sphi 0, %s90
      %s94 = sphi 0, %s93
      %s110 = sphi 0, %s94
    $region4: #{_prenorm_impl.1} parent=1 // loop_header_branch
      %15 = sbr.rel (%p13) target = $region8
    $region5: #{_prenorm_impl.1} parent=1 // loop_body
      %s17 = ssub.s32 %s12, 1
      %s18 = ssub.s32 %s12, 2
      %s19 = sadd.s32 %s12, 1
      %s20 = ssub.s32 %s12, %s19
      %p21 = scmp.eq.s32.totalorder %s20, 0
      %s23 = sadd.s32 %s22, 1
      %s24 = scalar_select %p21, %s22, %s23
      %p27 = pneg %p21
      %p28 = scmp.eq.s32.totalorder %s12, 1
      %p29 = por %p27, %p28
      %p30 = scmp.ne.s32.totalorder %s22, %s25
      %p31 = scmp.eq.s32.totalorder %s12, 0
      %p32 = por %p30, %p31
      %p33 = scmp.ne.s32.totalorder %s22, %s25
      %p34 = scmp.eq.s32.totalorder %s17, 1
      %p35 = por %p33, %p34
      %p36 = scmp.ne.s32.totalorder %s25, %s26
      %p37 = scmp.eq.s32.totalorder %s17, 0
      %p38 = por %p36, %p37
      %p39 = scmp.ne.s32.totalorder %s25, %s26
      %p40 = scmp.eq.s32.totalorder %s18, 1
      %p41 = por %p39, %p40
      %p43 = scmp.ne.s32.totalorder %s26, %s42
      %p44 = scmp.eq.s32.totalorder %s18, 0
      %p45 = por %p43, %p44
      %s47 = sadd.s32 %s46, 1
      %p50 = scmp.eq.s32.totalorder %s12, 1
      %p51 = scmp.ne.s32.totalorder %s46, %s48
      %p52 = scmp.eq.s32.totalorder %s12, 0
      %p53 = por %p51, %p52
      %p54 = scmp.ne.s32.totalorder %s46, %s48
      %p55 = scmp.eq.s32.totalorder %s17, 1
      %p56 = por %p54, %p55
      %p57 = scmp.ne.s32.totalorder %s48, %s49
      %p58 = scmp.eq.s32.totalorder %s17, 0
      %p59 = por %p57, %p58
      %p60 = scmp.ne.s32.totalorder %s48, %s49
      %p61 = scmp.eq.s32.totalorder %s18, 1
      %p62 = por %p60, %p61
      %p64 = scmp.ne.s32.totalorder %s49, %s63
      %p65 = scmp.eq.s32.totalorder %s18, 0
      %p66 = por %p64, %p65
      %s68 = sadd.s32 %s67, 1
      %p71 = scmp.eq.s32.totalorder %s12, 1
      %p72 = scmp.ne.s32.totalorder %s67, %s69
      %p73 = scmp.eq.s32.totalorder %s12, 0
      %p74 = por %p72, %p73
      %p75 = scmp.ne.s32.totalorder %s67, %s69
      %p76 = scmp.eq.s32.totalorder %s17, 1
      %p77 = por %p75, %p76
      %p78 = scmp.ne.s32.totalorder %s69, %s70
      %p79 = scmp.eq.s32.totalorder %s17, 0
      %p80 = por %p78, %p79
      %p81 = scmp.ne.s32.totalorder %s69, %s70
      %p82 = scmp.eq.s32.totalorder %s18, 1
      %p83 = por %p81, %p82
      %p85 = scmp.ne.s32.totalorder %s70, %s84
      %p86 = scmp.eq.s32.totalorder %s18, 0
      %p87 = por %p85, %p86
      %s88 = ssub.s32 %s12, %s19
      %p89 = scmp.eq.s32.totalorder %s88, 0
      %s91 = sadd.s32 %s90, 1
      %s92 = scalar_select %p89, %s90, %s91
      %p95 = pneg %p89
      %p96 = scmp.eq.s32.totalorder %s12, 1
      %p97 = por %p95, %p96
      %p98 = scmp.ne.s32.totalorder %s90, %s93
      %p99 = scmp.eq.s32.totalorder %s12, 0
      %p100 = por %p98, %p99
      %p101 = scmp.ne.s32.totalorder %s90, %s93
      %p102 = scmp.eq.s32.totalorder %s17, 1
      %p103 = por %p101, %p102
      %p104 = scmp.ne.s32.totalorder %s93, %s94
      %p105 = scmp.eq.s32.totalorder %s17, 0
      %p106 = por %p104, %p105
      %p107 = scmp.ne.s32.totalorder %s93, %s94
      %p108 = scmp.eq.s32.totalorder %s18, 1
      %p109 = por %p107, %p108
      %p111 = scmp.ne.s32.totalorder %s94, %s110
      %p112 = scmp.eq.s32.totalorder %s18, 0
      %p113 = por %p111, %p112
      %p114 = scmp.le.s32.totalorder 1, %s12
      %p115 = scmp.lt.s32.totalorder %s12, 3
      %p116 = pnand %p114, %p115
      %p117 = pneg %p116
      // Predicated region
      $region9: #{_prenorm_impl.1} parent=5 // pred_check
        _
      $region10: #{_prenorm_impl.1} parent=5 // pred_check_branch
        %119 = sbr.rel (%p116) target = $region12
      $region11: #{_prenorm_impl.1} parent=5 // pred_region
        %s120 = ssub.s32 %s12, 1
        // Predicated region
        $region13: #{_prenorm_impl.1} parent=11 // pred_check
          %p121 = pneg %p59
        $region14: #{_prenorm_impl.1} parent=11 // pred_check_branch
          %123 = sbr.rel (%p121) target = $region16
        $region15: #{_prenorm_impl.1} parent=11 // pred_region
          _
        $region16: #{_prenorm_impl.1} parent=11 // pred_fallthru
          _
        // Predicated region
        $region17: #{_prenorm_impl.1} parent=11 // pred_check
          %p124 = pneg %p80
        $region18: #{_prenorm_impl.1} parent=11 // pred_check_branch
          %126 = sbr.rel (%p124) target = $region20
        $region19: #{_prenorm_impl.1} parent=11 // pred_region
          _
        $region20: #{_prenorm_impl.1} parent=11 // pred_fallthru
          _
      $region12: #{_prenorm_impl.1} parent=5 // pred_fallthru
        _
      %p127 = scmp.lt.s32.totalorder %s12, 2
      // Predicated region
      $region21: #{_prenorm_impl.1} parent=5 // pred_check
        %p128 = pneg %p127
      $region22: #{_prenorm_impl.1} parent=5 // pred_check_branch
        %130 = sbr.rel (%p128) target = $region24
      $region23: #{_prenorm_impl.1} parent=5 // pred_region
        // Predicated region
        $region25: #{_prenorm_impl.1} parent=23 // pred_check
          %p131 = pneg %p32
        $region26: #{_prenorm_impl.1} parent=23 // pred_check_branch
          %133 = sbr.rel (%p131) target = $region28
        $region27: #{_prenorm_impl.1} parent=23 // pred_region
          %p134 = scmp.lt.s32.totalorder %s12, 1
          %s135 = scalar_select %p134, %s12, 1
          %s136 = smul.addr %s135, 8
          %s137 = scalar_lea.vmem %s0, %s136
        $region28: #{_prenorm_impl.1} parent=23 // pred_fallthru
          _
      $region24: #{_prenorm_impl.1} parent=5 // pred_fallthru
        _
      %p138 = scmp.le.s32.totalorder 1, %s12
      %p139 = scmp.lt.s32.totalorder %s12, 3
      %p140 = pnand %p138, %p139
      %p141 = pneg %p140
      // Predicated region
      $region29: #{_prenorm_impl.1} parent=5 // pred_check
        _
      $region30: #{_prenorm_impl.1} parent=5 // pred_check_branch
        %143 = sbr.rel (%p140) target = $region32
      $region31: #{_prenorm_impl.1} parent=5 // pred_region
        %s144 = ssub.s32 %s12, 1
        %p145 = scmp.lt.s32.totalorder %s17, 1
        %s146 = scalar_select %p145, %s17, 1
        %s147 = smul.addr %s146, 8
        %s148 = scalar_lea.vmem %s0, %s147
        %p149 = pneg %p38
        %p150 = pneg %p35
        %p151 = pneg %p59
        %p152 = pneg %p56
        %p153 = pneg %p80
        %p154 = pneg %p77
        %p155 = pneg %p106
        %p156 = pneg %p103
        %s157 = sand.u32 %s93, 1
        %s158 = scalar_lea.sflag [#allocation3], %s157
        %s159 = sand.u32 %s93, 1
        %s160 = smul.addr %s159, 8
        %s161 = scalar_lea.vmem [#allocation2], %s160
        %p162 = scmp.lt.s32.totalorder %s17, 1
        %s163 = scalar_select %p162, %s17, 1
        %s164 = smul.addr %s163, 8
        %s165 = scalar_lea.vmem %s0, %s164
        %v166 = vld [vmem:[%s165] sm:$0xff]
        %167 = vadd.xlane.f32.xlu0 %v166
        %v168 = vpop.xlane.xlu0 %167
        %v169 = vrcp.pop 128.0
        %v170 = vmul.f32 %v168, %v169
        %v171 = vsub.f32 %v166, %v170
        %v172 = vmul.f32 %v171, %v171
        %173 = vadd.xlane.f32.xlu0 %v172
        %v174 = vpop.xlane.xlu0 %173
        %v175 = vmul.f32 %v174, %v169
        %v176 = vadd.f32 %v175, 1e-05
        %v177 = vrsqrt.pop %v176
        %v178 = vmul.f32 %v171, %v177
        %v179 = vld [vmem:[%s1] sm:$0xff]
        %v180 = vld [vmem:[%s1 + $0x8] sm:$0xff]
        %v181 = vld [vmem:[%s1 + $0x10] sm:$0xff]
        %v182 = vld [vmem:[%s1 + $0x18] sm:$0xff]
        %v183 = vld [vmem:[%s1 + $0x20] sm:$0xff]
        %v184 = vld [vmem:[%s1 + $0x28] sm:$0xff]
        %v185 = vld [vmem:[%s1 + $0x30] sm:$0xff]
        %v186 = vld [vmem:[%s1 + $0x38] sm:$0xff]
        %v187 = vld [vmem:[%s1 + $0x40] sm:$0xff]
        %v188 = vld [vmem:[%s1 + $0x48] sm:$0xff]
        %v189 = vld [vmem:[%s1 + $0x50] sm:$0xff]
        %v190 = vld [vmem:[%s1 + $0x58] sm:$0xff]
        %v191 = vld [vmem:[%s1 + $0x60] sm:$0xff]
        %v192 = vld [vmem:[%s1 + $0x68] sm:$0xff]
        %v193 = vld [vmem:[%s1 + $0x70] sm:$0xff]
        %v194 = vld [vmem:[%s1 + $0x78] sm:$0xff]
        %v195 = vld [vmem:[%s2] sm:$0x1]
        %v197 = vlaneseq
        %v198 = vshrl.u32 %v197, 7
        %v199 = vsub.s32 0, %v198
        %v200 = vrot.slane %v195, %v199
        %202 = vmatprep.subr.mxu0 0.0
        %203 = vmatpush1.msra.mxu0 %v194
        %204 = vmatprep.subr.mxu0 0.0
        %205 = vmatpush1.msra.mxu0 %v193
        %206 = vmatprep.subr.mxu0 0.0
        %207 = vmatpush1.msra.mxu0 %v192
        %208 = vmatprep.subr.mxu0 0.0
        %209 = vmatpush1.msra.mxu0 %v191
        %210 = vmatprep.subr.mxu0 0.0
        %211 = vmatpush1.msra.mxu0 %v190
        %212 = vmatprep.subr.mxu0 0.0
        %213 = vmatpush1.msra.mxu0 %v189
        %214 = vmatprep.subr.mxu0 0.0
        %215 = vmatpush1.msra.mxu0 %v188
        %216 = vmatprep.subr.mxu0 0.0
        %217 = vmatpush1.msra.mxu0 %v187
        %218 = vmatprep.subr.mxu0 0.0
        %219 = vmatpush1.msra.mxu0 %v186
        %220 = vmatprep.subr.mxu0 0.0
        %221 = vmatpush1.msra.mxu0 %v185
        %222 = vmatprep.subr.mxu0 0.0
        %223 = vmatpush1.msra.mxu0 %v184
        %224 = vmatprep.subr.mxu0 0.0
        %225 = vmatpush1.msra.mxu0 %v183
        %226 = vmatprep.subr.mxu0 0.0
        %227 = vmatpush1.msra.mxu0 %v182
        %228 = vmatprep.subr.mxu0 0.0
        %229 = vmatpush1.msra.mxu0 %v181
        %230 = vmatprep.subr.mxu0 0.0
        %231 = vmatpush1.msra.mxu0 %v180
        %232 = vmatprep.subr.mxu0 0.0
        %233 = vmatpush1.msra.mxu0 %v179
        %234 = vmatprep.subr.mxu0 0.0
        %235 = vmatpush2.msra.mxu0 0.0
        %236 = vmatprep.subr.mxu0 0.0
        %237 = vmatpush2.msra.mxu0 0.0
        %238 = vmatprep.subr.mxu0 0.0
        %239 = vmatpush2.msra.mxu0 0.0
        %240 = vmatprep.subr.mxu0 0.0
        %241 = vmatpush2.msra.mxu0 0.0
        %242 = vmatprep.subr.mxu0 0.0
        %243 = vmatpush2.msra.mxu0 0.0
        %244 = vmatprep.subr.mxu0 0.0
        %245 = vmatpush2.msra.mxu0 0.0
        %246 = vmatprep.subr.mxu0 0.0
        %247 = vmatpush2.msra.mxu0 0.0
        %248 = vmatprep.subr.mxu0 0.0
        %249 = vmatpush2.msra.mxu0 0.0
        %250 = vmatprep.subr.mxu0 0.0
        %251 = vmatpush2.msra.mxu0 0.0
        %252 = vmatprep.subr.mxu0 0.0
        %253 = vmatpush2.msra.mxu0 0.0
        %254 = vmatprep.subr.mxu0 0.0
        %255 = vmatpush2.msra.mxu0 0.0
        %256 = vmatprep.subr.mxu0 0.0
        %257 = vmatpush2.msra.mxu0 0.0
        %258 = vmatprep.subr.mxu0 0.0
        %259 = vmatpush2.msra.mxu0 0.0
        %260 = vmatprep.subr.mxu0 0.0
        %261 = vmatpush2.msra.mxu0 0.0
        %262 = vmatprep.subr.mxu0 0.0
        %263 = vmatpush2.msra.mxu0 0.0
        %264 = vmatprep.subr.mxu0 0.0
        %265 = vmatpush2.msra.mxu0 0.0
        %266 = vmatprep.mubr.f32.mxu0 0.0
        %267 = vmatmul.mubr.f32.gmra.mxu0 %v178
        %v268 = vpop.f32.mrf.mxu0
        %v269 = vadd.f32 %v200, %v268
        %v270 = vpop.f32.mrf.mxu0
        %271 = vdwg.mxu0
        %272 = vst [vmem:[%s161] sm:$0xff] %v269
        %s273 = sand.u32 %s93, 1
        %s274 = scalar_lea.sflag [#allocation3], %s273
        %s275 = sand.u32 %s93, 1
        %s276 = smul.addr %s275, 8
        %s277 = scalar_lea.vmem [#allocation2], %s276
        // Predicated region
        $region33: #{_prenorm_impl.1} parent=31 // pred_check
          %p278 = pneg %p103
        $region34: #{_prenorm_impl.1} parent=31 // pred_check_branch
          %280 = sbr.rel (%p278) target = $region36
        $region35: #{_prenorm_impl.1} parent=31 // pred_region
          %s282 = ssub.s32 128, 128
          %283 = vsyncadd %s274, %s282
          %s284 = smul.addr %s17, 128
          %s285 = scalar_lea.hbm %s3, %s284
          %s287 = sshll.u32 %s277, 4
          %s288 = int_to_ptr.vmem [resolvable:$true] %s287
          %290 = dma.vmem_to_hbm [thread:$0]  %s288, 128, %s285, %s274
        $region36: #{_prenorm_impl.1} parent=31 // pred_fallthru
          _
      $region32: #{_prenorm_impl.1} parent=5 // pred_fallthru
        _
      %p291 = scmp.le.s32.totalorder 2, %s12
      // Predicated region
      $region37: #{_prenorm_impl.1} parent=5 // pred_check
        %p292 = pneg %p291
      $region38: #{_prenorm_impl.1} parent=5 // pred_check_branch
        %294 = sbr.rel (%p292) target = $region40
      $region39: #{_prenorm_impl.1} parent=5 // pred_region
        %s295 = ssub.s32 %s12, 2
        // Predicated region
        $region41: #{_prenorm_impl.1} parent=39 // pred_check
          %p296 = pneg %p109
        $region42: #{_prenorm_impl.1} parent=39 // pred_check_branch
          %298 = sbr.rel (%p296) target = $region44
        $region43: #{_prenorm_impl.1} parent=39 // pred_region
          %s299 = sand.u32 %s94, 1
          %s300 = scalar_lea.sflag [#allocation3], %s299
          %s301 = sand.u32 %s94, 1
          %s302 = smul.addr %s301, 8
          %s303 = scalar_lea.vmem [#allocation2], %s302
          %304 = dma.done %s300, 128
        $region44: #{_prenorm_impl.1} parent=39 // pred_fallthru
          _
      $region40: #{_prenorm_impl.1} parent=5 // pred_fallthru
        _
    $region6: #{_prenorm_impl.1} parent=1 // loop_footer
      %s16 = sadd.s32 1, %s12
    $region7: #{_prenorm_impl.1} parent=1 // loop_footer_branch
      %11 = sbr.rel target = $region3
    $region8: #{_prenorm_impl.1} parent=1 // loop_exit
      _
    %305 = vsyncpa [#allocation3], 1
    %s306 = scalar_lea.sflag [#allocation3], 1
    %307 = vsyncpa %s306, 1

</llo_original>
